<compile_context>
chip_gen: v6e
topology: v6e:2x2x1
jax: 0.10.0
libtpu: 0.0.40
codegen_flags: <defaults>
</compile_context>

<pallas_src>
import jax
import jax.numpy as jnp
from jax.experimental import pallas as pl
from jax.experimental.pallas import tpu as pltpu

MIDDLE_SHAPE = 256


def _mlp_kernel(state_ref, action_ref, w1_ref, b1_ref, w2_ref, b2_ref,
                w3_ref, b3_ref, out_ref):
    """relu(relu([s,a]@W1+b1)@W2+b2)@W3+b3 for one batch tile (concat fused)."""
    # Layer 1: in-VMEM lane concat -> single K=(state+action) bf16 MXU dot,
    # f32 accumulation.
    sa = jnp.concatenate([state_ref[...], action_ref[...]], axis=-1)
    sa = sa.astype(jnp.bfloat16)
    h1 = jnp.dot(sa, w1_ref[...], preferred_element_type=jnp.float32) + b1_ref[...]
    h1 = jnp.maximum(h1, 0.0)                                    # f32 VPU

    # Layer 2: bf16 MXU dot, f32 accumulation, f32 elementwise.
    h2 = jnp.dot(h1.astype(jnp.bfloat16), w2_ref[...],
                 preferred_element_type=jnp.float32) + b2_ref[...]
    h2 = jnp.maximum(h2, 0.0)

    # Layer 3 (out_features == 1): VPU multiply + XLU row reduction instead of
    # an MXU matmul that would occupy a single output lane.
    w3_row = w3_ref[...].astype(jnp.float32)                     # (1, 256)
    q1 = jnp.sum(h2 * w3_row, axis=-1, keepdims=True) + b3_ref[0, 0]
    out_ref[...] = q1.astype(out_ref.dtype)


def random_reward_forward(state, action, params, *,
                          batch_tile=2048, core_parallel=False):
    """Equivalent of RandomReward.forward(state, action) -> q1 of shape (B, 1).

    Set core_parallel=True on v7x (2 TensorCores/chip) to shard batch tiles
    across both cores; leave False on single-TC v5e/v6e.
    """
    B, state_dim = state.shape
    B2, action_dim = action.shape
    assert B2 == B, "state/action batch mismatch"
    in_dim = state_dim + action_dim

    w1, b1 = params["w1"], params["b1"]
    w2, b2 = params["w2"], params["b2"]
    w3, b3 = params["w3"], params["b3"]
    assert w1.shape == (in_dim, MIDDLE_SHAPE)

    # Batch-tile selection: one full-array block at small B (full-dim blocks
    # are exempt from the (8,128) tiling rule); otherwise a large multiple of
    # 16 (bf16 sublane packing) so per-step overhead is amortized.
    if B <= batch_tile:
        TB = B
    else:
        TB = max(16, (batch_tile // 16) * 16)
    grid = (pl.cdiv(B, TB),)   # last block may be partial; OOB writes dropped

    def resident(arr):  # full-array block, same tile every grid step
        nd = arr.ndim
        return pl.BlockSpec(arr.shape, lambda i, _nd=nd: (0,) * _nd)

    flops = 2 * B * (in_dim * MIDDLE_SHAPE
                     + MIDDLE_SHAPE * MIDDLE_SHAPE
                     + MIDDLE_SHAPE)
    bytes_accessed = (int(state.size) * state.dtype.itemsize
                      + int(action.size) * action.dtype.itemsize
                      + sum(int(p.size) * p.dtype.itemsize
                            for p in (w1, b1, w2, b2, w3, b3))
                      + B * 4)

    semantics = (pltpu.CORE_PARALLEL,) if core_parallel else (pltpu.PARALLEL,)

    out = pl.pallas_call(
        _mlp_kernel,
        out_shape=jax.ShapeDtypeStruct((B, 1), jnp.float32),
        grid=grid,
        in_specs=[
            pl.BlockSpec((TB, state_dim), lambda i: (i, 0)),    # state tile
            pl.BlockSpec((TB, action_dim), lambda i: (i, 0)),   # action tile
            resident(w1), resident(b1),
            resident(w2), resident(b2),
            resident(w3),
            pl.BlockSpec(memory_space=pltpu.MemorySpace.SMEM),  # b3 (1,1) scalar
        ],
        out_specs=pl.BlockSpec((TB, 1), lambda i: (i, 0)),
        compiler_params=pltpu.CompilerParams(
            dimension_semantics=semantics,
            vmem_limit_bytes=32 * 1024 * 1024),
        cost_estimate=pl.CostEstimate(flops=flops, transcendentals=0,
                                      bytes_accessed=bytes_accessed),
    )(state, action, w1, b1, w2, b2, w3, b3)

    return out


def init_params(key, state_dim, action_dim, weight_dtype=jnp.bfloat16):
    """nn.Linear-style init U(-1/sqrt(fan_in), 1/sqrt(fan_in)).

    Weights are (in_features, out_features) bf16 (intentional precision
    difference vs the f32 PyTorch module); biases are f32.  W1 is stored
    already stacked over [state | action] columns.
    """
    def uniform(k, shape, fan_in, dtype):
        bound = float(fan_in) ** -0.5
        return jax.random.uniform(k, shape, jnp.float32, -bound, bound).astype(dtype)

    k1, kb1, k2, kb2, k3, kb3 = jax.random.split(key, 6)
    fan1 = state_dim + action_dim
    return {
        "w1": uniform(k1, (fan1, MIDDLE_SHAPE), fan1, weight_dtype),
        "b1": uniform(kb1, (1, MIDDLE_SHAPE), fan1, jnp.float32),
        "w2": uniform(k2, (MIDDLE_SHAPE, MIDDLE_SHAPE), MIDDLE_SHAPE, weight_dtype),
        "b2": uniform(kb2, (1, MIDDLE_SHAPE), MIDDLE_SHAPE, jnp.float32),
        "w3": uniform(k3, (1, MIDDLE_SHAPE), MIDDLE_SHAPE, weight_dtype),
        "b3": uniform(kb3, (1, 1), MIDDLE_SHAPE, jnp.float32),
    }


def _reference_forward(state, action, params):
    """Pure-JAX reference mirroring the kernel's bf16-operand / f32-acc math."""
    def bdot(x, w):
        return jnp.dot(x.astype(jnp.bfloat16), w,
                       preferred_element_type=jnp.float32)

    sa = jnp.concatenate([state, action], axis=1)
    h1 = jnp.maximum(bdot(sa, params["w1"]) + params["b1"], 0.0)
    h2 = jnp.maximum(bdot(h1, params["w2"]) + params["b2"], 0.0)
    q1 = (jnp.sum(h2 * params["w3"].astype(jnp.float32), axis=-1, keepdims=True)
          + params["b3"][0, 0])
    return q1


if __name__ == "__main__":
    key = jax.random.PRNGKey(0)
    k_params, k_state, k_action = jax.random.split(key, 3)

    batch = 8
    state_dim = 16
    action_dim = 8

    params = init_params(k_params, state_dim, action_dim)
    # Cast activations to bf16 at the producer (halves per-row HBM traffic).
    state = jax.random.normal(k_state, (batch, state_dim),
                              jnp.float32).astype(jnp.bfloat16)
    action = jax.random.normal(k_action, (batch, action_dim),
                               jnp.float32).astype(jnp.bfloat16)

    q1 = random_reward_forward(state, action, params)
    jax.block_until_ready(q1)

    ref = _reference_forward(state, action, params)
    assert q1.shape == (batch, 1)
    assert jnp.allclose(q1, ref, atol=2e-2, rtol=2e-2), (
        f"max abs err {float(jnp.max(jnp.abs(q1 - ref)))}")

    print("KERNEL_OK")
</pallas_src>

<mosaic_0001>
module attributes {stable_mosaic.version = 11 : i64} {
  func.func @_mlp_kernel(%arg0: i32, %arg1: memref<8x16xbf16, #tpu.memory_space<vmem>>, %arg2: memref<8x8xbf16, #tpu.memory_space<vmem>>, %arg3: memref<24x256xbf16, #tpu.memory_space<vmem>>, %arg4: memref<1x256xf32, #tpu.memory_space<vmem>>, %arg5: memref<256x256xbf16, #tpu.memory_space<vmem>>, %arg6: memref<1x256xf32, #tpu.memory_space<vmem>>, %arg7: memref<1x256xbf16, #tpu.memory_space<vmem>>, %arg8: memref<1x1xf32, #tpu.memory_space<smem>>, %arg9: memref<8x1xf32, #tpu.memory_space<vmem>>) attributes {dimension_semantics = [#tpu.dimension_semantics<parallel>], iteration_bounds = array<i64: 1>, scalar_prefetch = 0 : i64, scratch_operands = 0 : i64, tpu.core_type = #tpu.core_type<tc>, window_params = [{transform_indices = @transform_0, window_bounds = array<i64: 8, 16>}, {transform_indices = @transform_1, window_bounds = array<i64: 8, 8>}, {pipeline_mode = #tpu.pipeline_mode<synchronous>, transform_indices = @transform_2, window_bounds = array<i64: 24, 256>}, {pipeline_mode = #tpu.pipeline_mode<synchronous>, transform_indices = @transform_3, window_bounds = array<i64: 1, 256>}, {pipeline_mode = #tpu.pipeline_mode<synchronous>, transform_indices = @transform_4, window_bounds = array<i64: 256, 256>}, {pipeline_mode = #tpu.pipeline_mode<synchronous>, transform_indices = @transform_5, window_bounds = array<i64: 1, 256>}, {pipeline_mode = #tpu.pipeline_mode<synchronous>, transform_indices = @transform_6, window_bounds = array<i64: 1, 256>}, {transform_indices = @transform_7, window_bounds = array<i64: 1, 1>}, {transform_indices = @transform_8, window_bounds = array<i64: 8, 1>}]} {
    %c0 = arith.constant 0 : index
    %c0_0 = arith.constant 0 : index
    %0 = vector.load %arg1[%c0, %c0_0] : memref<8x16xbf16, #tpu.memory_space<vmem>>, vector<8x16xbf16>
    %c0_1 = arith.constant 0 : index
    %c0_2 = arith.constant 0 : index
    %1 = vector.load %arg2[%c0_1, %c0_2] : memref<8x8xbf16, #tpu.memory_space<vmem>>, vector<8x8xbf16>
    %2 = tpu.concatenate %0, %1 in 1 : vector<8x16xbf16>, vector<8x8xbf16> -> vector<8x24xbf16>
    %c0_3 = arith.constant 0 : index
    %c0_4 = arith.constant 0 : index
    %3 = vector.load %arg3[%c0_3, %c0_4] : memref<24x256xbf16, #tpu.memory_space<vmem>>, vector<24x256xbf16>
    %cst = arith.constant dense<0.000000e+00> : vector<8x256xf32>
    %4 = tpu.matmul %2, %3, %cst {dimension_numbers = #tpu.dot_dimension_numbers<[1], [0], [0], [1], [0, 0, 1, 1], [], []>} : vector<8x24xbf16>, vector<24x256xbf16>, vector<8x256xf32> -> vector<8x256xf32>
    %c0_5 = arith.constant 0 : index
    %c0_6 = arith.constant 0 : index
    %5 = vector.load %arg4[%c0_5, %c0_6] : memref<1x256xf32, #tpu.memory_space<vmem>>, vector<1x256xf32>
    %6 = vector.broadcast %5 : vector<1x256xf32> to vector<8x256xf32>
    %7 = arith.addf %4, %6 : vector<8x256xf32>
    %cst_7 = arith.constant 0.000000e+00 : f32
    %8 = vector.broadcast %cst_7 : f32 to vector<8x256xf32>
    %9 = arith.maximumf %7, %8 : vector<8x256xf32>
    %10 = arith.truncf %9 : vector<8x256xf32> to vector<8x256xbf16>
    %c0_8 = arith.constant 0 : index
    %c0_9 = arith.constant 0 : index
    %11 = vector.load %arg5[%c0_8, %c0_9] : memref<256x256xbf16, #tpu.memory_space<vmem>>, vector<256x256xbf16>
    %cst_10 = arith.constant dense<0.000000e+00> : vector<8x256xf32>
    %12 = tpu.matmul %10, %11, %cst_10 {dimension_numbers = #tpu.dot_dimension_numbers<[1], [0], [0], [1], [0, 0, 1, 1], [], []>} : vector<8x256xbf16>, vector<256x256xbf16>, vector<8x256xf32> -> vector<8x256xf32>
    %c0_11 = arith.constant 0 : index
    %c0_12 = arith.constant 0 : index
    %13 = vector.load %arg6[%c0_11, %c0_12] : memref<1x256xf32, #tpu.memory_space<vmem>>, vector<1x256xf32>
    %14 = vector.broadcast %13 : vector<1x256xf32> to vector<8x256xf32>
    %15 = arith.addf %12, %14 : vector<8x256xf32>
    %cst_13 = arith.constant 0.000000e+00 : f32
    %16 = vector.broadcast %cst_13 : f32 to vector<8x256xf32>
    %17 = arith.maximumf %15, %16 : vector<8x256xf32>
    %c0_14 = arith.constant 0 : index
    %c0_15 = arith.constant 0 : index
    %18 = vector.load %arg7[%c0_14, %c0_15] : memref<1x256xbf16, #tpu.memory_space<vmem>>, vector<1x256xbf16>
    %19 = arith.extf %18 : vector<1x256xbf16> to vector<1x256xf32>
    %20 = vector.broadcast %19 : vector<1x256xf32> to vector<8x256xf32>
    %21 = arith.mulf %17, %20 : vector<8x256xf32>
    %cst_16 = arith.constant dense<0.000000e+00> : vector<8xf32>
    %22 = vector.multi_reduction <add>, %21, %cst_16 [1] : vector<8x256xf32> to vector<8xf32>
    %23 = vector.shape_cast %22 : vector<8xf32> to vector<8x1xf32>
    %c0_17 = arith.constant 0 : index
    %c0_18 = arith.constant 0 : index
    %24 = memref.load %arg8[%c0_17, %c0_18] : memref<1x1xf32, #tpu.memory_space<smem>>
    %25 = vector.broadcast %24 : f32 to vector<8x1xf32>
    %26 = arith.addf %23, %25 : vector<8x1xf32>
    %c0_19 = arith.constant 0 : index
    %c0_20 = arith.constant 0 : index
    %27 = vector.load %arg9[%c0_19, %c0_20] : memref<8x1xf32, #tpu.memory_space<vmem>>, vector<8x1xf32>
    tpu.vector_store %arg9[%c0_19, %c0_20], %26 {strides = array<i32>} : memref<8x1xf32, #tpu.memory_space<vmem>>, vector<8x1xf32>,
    return
  }
  func.func @transform_0(%arg0: i32) -> (i32, i32) {
    %c0_i32 = arith.constant 0 : i32
    %c0_i32_0 = arith.constant 0 : i32
    return %arg0, %c0_i32 : i32, i32
  }
  func.func @transform_1(%arg0: i32) -> (i32, i32) {
    %c0_i32 = arith.constant 0 : i32
    %c0_i32_0 = arith.constant 0 : i32
    return %arg0, %c0_i32 : i32, i32
  }
  func.func @transform_2(%arg0: i32) -> (i32, i32) {
    %c0_i32 = arith.constant 0 : i32
    %c0_i32_0 = arith.constant 0 : i32
    %c0_i32_1 = arith.constant 0 : i32
    return %c0_i32, %c0_i32_0 : i32, i32
  }
  func.func @transform_3(%arg0: i32) -> (i32, i32) {
    %c0_i32 = arith.constant 0 : i32
    %c0_i32_0 = arith.constant 0 : i32
    %c0_i32_1 = arith.constant 0 : i32
    return %c0_i32, %c0_i32_0 : i32, i32
  }
  func.func @transform_4(%arg0: i32) -> (i32, i32) {
    %c0_i32 = arith.constant 0 : i32
    %c0_i32_0 = arith.constant 0 : i32
    %c0_i32_1 = arith.constant 0 : i32
    return %c0_i32, %c0_i32_0 : i32, i32
  }
  func.func @transform_5(%arg0: i32) -> (i32, i32) {
    %c0_i32 = arith.constant 0 : i32
    %c0_i32_0 = arith.constant 0 : i32
    %c0_i32_1 = arith.constant 0 : i32
    return %c0_i32, %c0_i32_0 : i32, i32
  }
  func.func @transform_6(%arg0: i32) -> (i32, i32) {
    %c0_i32 = arith.constant 0 : i32
    %c0_i32_0 = arith.constant 0 : i32
    %c0_i32_1 = arith.constant 0 : i32
    return %c0_i32, %c0_i32_0 : i32, i32
  }
  func.func @transform_7(%arg0: i32) -> (i32, i32) {
    %c0_i32 = arith.constant 0 : i32
    %c0_i32_0 = arith.constant 0 : i32
    %c0_i32_1 = arith.constant 0 : i32
    return %c0_i32, %c0_i32_0 : i32, i32
  }
  func.func @transform_8(%arg0: i32) -> (i32, i32) {
    %c0_i32 = arith.constant 0 : i32
    %c0_i32_0 = arith.constant 0 : i32
    return %arg0, %c0_i32 : i32, i32
  }
}

</mosaic_0001>

<llo_original>
// kernel: tpu_custom_call.1
$region0: #{tpu_custom_call.1}
  #allocation0 [shape = 'u32[]', space=smem, size = 0x4, offset = 0x4, fixed_abs, tag = 'smem constant byte address 0x4 - core index']
  #allocation1 [shape = 'u32[144,128]{1,0:T(1,128)}', space=vmem, size = 0x12000, scoped, tag = 'internal scratch']
  #allocation2 [shape = 'f32[1,1]{1,0:T(1,128)S(6)}', space=smem, size = 0x200, scoped, tag = 'scoped memory for tpu_custom_call.1']
  %s0 = inlined_call_operand.hbm [shape: bf16[8,16], index: 0, kind: input, shape index: {}]
  %s1 = inlined_call_operand.hbm [shape: bf16[8,8], index: 1, kind: input, shape index: {}]
  %s2 = inlined_call_operand.hbm [shape: bf16[24,256], index: 2, kind: input, shape index: {}]
  %s3 = inlined_call_operand.vmem [shape: f32[1,256], index: 3, kind: input, shape index: {}]
  %s4 = inlined_call_operand.hbm [shape: bf16[256,256], index: 4, kind: input, shape index: {}]
  %s5 = inlined_call_operand.vmem [shape: f32[1,256], index: 5, kind: input, shape index: {}]
  %s6 = inlined_call_operand.vmem [shape: bf16[1,256], index: 6, kind: input, shape index: {}]
  %s7 = inlined_call_operand.<no memory space> [shape: f32[1,1], index: 7, kind: input, shape index: {}]
  %s8 = inlined_call_operand.vmem [shape: f32[8,1], index: 8, kind: output, shape index: {}]
  %s9 = sld [smem:[#allocation0]]
  $region58: #{tpu_custom_call.1} parent=0
    _
  %s11 = ssub.s32 1, %s9
  %s12 = scalar_select 0, %s11, %s9
  %13 = sst [smem:[#allocation2]] %s7
  $region1: #{tpu_custom_call.1} parent=0
    #allocation3 [shape = 'u8[2048]{0}', space=vmem, size = 0x800, scoped, tag = 'input window, operand 0, single buffered']
    #allocation4 [shape = 's32[1]{0}', space=sflag, size = 0x4, scoped, tag = 'scoped memory for tpu_custom_call.1']
    #allocation5 [shape = 'u8[2048]{0}', space=vmem, size = 0x800, scoped, tag = 'input window, operand 1, single buffered']
    #allocation6 [shape = 's32[1]{0}', space=sflag, size = 0x4, scoped, tag = 'scoped memory for tpu_custom_call.1']
    #allocation7 [shape = 'u8[12288]{0}', space=vmem, size = 0x3000, scoped, tag = 'input window, operand 2, single buffered']
    #allocation8 [shape = 'u8[131072]{0}', space=vmem, size = 0x20000, scoped, tag = 'input window, operand 4, single buffered']
    #allocation9 [shape = 's32[1]{0}', space=sflag, size = 0x4, scoped, tag = 'scoped memory for tpu_custom_call.1']
    %14 = vsyncpa [#allocation4], 0
    %15 = vsyncpa [#allocation6], 0
    %16 = vsyncpa [#allocation9], 0
    // Predicated region
    $region2: #{tpu_custom_call.1} parent=1 // pred_check
      _
    $region3: #{tpu_custom_call.1} parent=1 // pred_check_branch
      %18 = sbr.rel (0) target = $region5
    $region4: #{tpu_custom_call.1} parent=1 // pred_region
      %s20 = ssub.s32 64, 64
      %21 = vsyncadd [#allocation4], %s20
      %s23 = sshll.u32 [#allocation3], 4
      %s24 = int_to_ptr.vmem [resolvable:$true] %s23
      %26 = dma.hbm_to_vmem [thread:$0]  %s0, 64, %s24, [#allocation4]
    $region5: #{tpu_custom_call.1} parent=1 // pred_fallthru
      _
    // Predicated region
    $region6: #{tpu_custom_call.1} parent=1 // pred_check
      _
    $region7: #{tpu_custom_call.1} parent=1 // pred_check_branch
      %28 = sbr.rel (0) target = $region9
    $region8: #{tpu_custom_call.1} parent=1 // pred_region
      %s30 = ssub.s32 64, 64
      %31 = vsyncadd [#allocation6], %s30
      %s33 = sshll.u32 [#allocation5], 4
      %s34 = int_to_ptr.vmem [resolvable:$true] %s33
      %36 = dma.hbm_to_vmem [thread:$0]  %s1, 64, %s34, [#allocation6]
    $region9: #{tpu_custom_call.1} parent=1 // pred_fallthru
      _
    // Predicated region
    $region10: #{tpu_custom_call.1} parent=1 // pred_check
      _
    $region11: #{tpu_custom_call.1} parent=1 // pred_check_branch
      %38 = sbr.rel (0) target = $region13
    $region12: #{tpu_custom_call.1} parent=1 // pred_region
      %s40 = ssub.s32 384, 384
      %41 = vsyncadd [#allocation6], %s40
      %s42 = sshll.u32 [#allocation7], 4
      %s43 = int_to_ptr.vmem [resolvable:$true] %s42
      %48 = dma.hbm_to_vmem [thread:$0]  %s2, 384, %s43, [#allocation6], 128, 128, 8
    $region13: #{tpu_custom_call.1} parent=1 // pred_fallthru
      _
    // Predicated region
    $region14: #{tpu_custom_call.1} parent=1 // pred_check
      _
    $region15: #{tpu_custom_call.1} parent=1 // pred_check_branch
      %50 = sbr.rel (0) target = $region17
    $region16: #{tpu_custom_call.1} parent=1 // pred_region
      _
    $region17: #{tpu_custom_call.1} parent=1 // pred_fallthru
      _
    // Predicated region
    $region18: #{tpu_custom_call.1} parent=1 // pred_check
      _
    $region19: #{tpu_custom_call.1} parent=1 // pred_check_branch
      %52 = sbr.rel (0) target = $region21
    $region20: #{tpu_custom_call.1} parent=1 // pred_region
      %s54 = ssub.s32 4096, 4096
      %55 = vsyncadd [#allocation9], %s54
      %s56 = sshll.u32 [#allocation8], 4
      %s57 = int_to_ptr.vmem [resolvable:$true] %s56
      %62 = dma.hbm_to_vmem [thread:$0]  %s4, 4096, %s57, [#allocation9], 128, 128, 8
    $region21: #{tpu_custom_call.1} parent=1 // pred_fallthru
      _
    // Predicated region
    $region22: #{tpu_custom_call.1} parent=1 // pred_check
      _
    $region23: #{tpu_custom_call.1} parent=1 // pred_check_branch
      %64 = sbr.rel (0) target = $region25
    $region24: #{tpu_custom_call.1} parent=1 // pred_region
      _
    $region25: #{tpu_custom_call.1} parent=1 // pred_fallthru
      _
    // Predicated region
    $region26: #{tpu_custom_call.1} parent=1 // pred_check
      _
    $region27: #{tpu_custom_call.1} parent=1 // pred_check_branch
      %66 = sbr.rel (0) target = $region29
    $region28: #{tpu_custom_call.1} parent=1 // pred_region
      _
    $region29: #{tpu_custom_call.1} parent=1 // pred_fallthru
      _
    // Predicated region
    $region30: #{tpu_custom_call.1} parent=1 // pred_check
      _
    $region31: #{tpu_custom_call.1} parent=1 // pred_check_branch
      %68 = sbr.rel (0) target = $region33
    $region32: #{tpu_custom_call.1} parent=1 // pred_region
      _
    $region33: #{tpu_custom_call.1} parent=1 // pred_fallthru
      _
    // Predicated region
    $region34: #{tpu_custom_call.1} parent=1 // pred_check
      _
    $region35: #{tpu_custom_call.1} parent=1 // pred_check_branch
      %70 = sbr.rel (0) target = $region37
    $region36: #{tpu_custom_call.1} parent=1 // pred_region
      %71 = dma.done [#allocation4], 64
    $region37: #{tpu_custom_call.1} parent=1 // pred_fallthru
      _
    // Predicated region
    $region38: #{tpu_custom_call.1} parent=1 // pred_check
      _
    $region39: #{tpu_custom_call.1} parent=1 // pred_check_branch
      %73 = sbr.rel (0) target = $region41
    $region40: #{tpu_custom_call.1} parent=1 // pred_region
      %74 = dma.done [#allocation6], 64
    $region41: #{tpu_custom_call.1} parent=1 // pred_fallthru
      _
    // Predicated region
    $region42: #{tpu_custom_call.1} parent=1 // pred_check
      _
    $region43: #{tpu_custom_call.1} parent=1 // pred_check_branch
      %76 = sbr.rel (0) target = $region45
    $region44: #{tpu_custom_call.1} parent=1 // pred_region
      %77 = dma.done [#allocation6], 384
    $region45: #{tpu_custom_call.1} parent=1 // pred_fallthru
      _
    // Predicated region
    $region46: #{tpu_custom_call.1} parent=1 // pred_check
      _
    $region47: #{tpu_custom_call.1} parent=1 // pred_check_branch
      %79 = sbr.rel (0) target = $region49
    $region48: #{tpu_custom_call.1} parent=1 // pred_region
      %80 = dma.done [#allocation9], 4096
    $region49: #{tpu_custom_call.1} parent=1 // pred_fallthru
      _
    %v82 = vld [vmem:[#allocation3] sm:$0xf]
    %v83 = vld [vmem:[#allocation5] sm:$0xf]
    %v85 = vunpack.c.l.b16 %v83
    %v86 = vpack.c.b16 %v85, %v85
    %87 = vrot.lane.b32.xlu0 %v86, 16
    %v88 = vpop.permute.xlu0 %87
    %vm89 = vcmask 130048
    %v92 = vsel %vm89, %v82, %v88
    %v93 = vld [vmem:[#allocation7] sm:$0xff]
    %v94 = vld [vmem:[#allocation7 + $0x8] sm:$0xff]
    %v95 = vld [vmem:[#allocation7 + $0x10] sm:$0xff]
    %v96 = vld [vmem:[%s3] sm:$0x3]
    %v98 = vlaneseq
    %v99 = vshrl.u32 %v98, 7
    %v100 = vsub.s32 0, %v99
    %v101 = vrot.slane %v96, %v100
    %v102 = vlaneseq
    %v103 = vshrl.u32 %v102, 7
    %v104 = vsub.s32 1, %v103
    %v105 = vrot.slane %v96, %v104
    %v111 = vunpack.c.l.b16 %v93
    %v112 = vunpack.c.h.b16 %v93
    %v113 = vunpack.c.l.b16 %v94
    %v114 = vunpack.c.h.b16 %v94
    %v115 = vunpack.c.l.b16 %v95
    %v116 = vunpack.c.h.b16 %v95
    %v117 = vpack.c.b16 %v113, %v111
    %v118 = vpack.c.b16 %v114, %v112
    %v119 = vpack.c.b16 %v115, %v115
    %v120 = vpack.c.b16 %v116, %v116
    %vm123 = vcmask 195584
    %v124 = vsel %vm123, %v92, 0
    %vm126 = vcmask 1043456
    %v128 = vsel %vm126, %v119, 0
    %v131 = vsel %vm126, %v120, 0
    %133 = vmatprep.subr.bf16.mxu0 0
    %134 = vmatpush1.bf16.msra.mxu0 0
    %135 = vmatprep.subr.bf16.mxu0 0
    %136 = vmatpush1.bf16.msra.mxu0 0
    %137 = vmatprep.subr.bf16.mxu0 0
    %138 = vmatpush1.bf16.msra.mxu0 0
    %139 = vmatprep.subr.bf16.mxu0 0
    %140 = vmatpush1.bf16.msra.mxu0 0
    %141 = vmatprep.subr.bf16.mxu0 0
    %142 = vmatpush1.bf16.msra.mxu0 0
    %143 = vmatprep.subr.bf16.mxu0 0
    %144 = vmatpush1.bf16.msra.mxu0 0
    %145 = vmatprep.subr.bf16.mxu0 %v131
    %146 = vmatpush1.bf16.msra.mxu0 %v128
    %147 = vmatprep.subr.bf16.mxu0 %v118
    %148 = vmatpush1.bf16.msra.mxu0 %v117
    %149 = vmatprep.subr.bf16.mxu0 0
    %150 = vmatpush2.bf16.msra.mxu0 0
    %151 = vmatprep.subr.bf16.mxu0 0
    %152 = vmatpush2.bf16.msra.mxu0 0
    %153 = vmatprep.subr.bf16.mxu0 0
    %154 = vmatpush2.bf16.msra.mxu0 0
    %155 = vmatprep.subr.bf16.mxu0 0
    %156 = vmatpush2.bf16.msra.mxu0 0
    %157 = vmatprep.subr.bf16.mxu0 0
    %158 = vmatpush2.bf16.msra.mxu0 0
    %159 = vmatprep.subr.bf16.mxu0 0
    %160 = vmatpush2.bf16.msra.mxu0 0
    %161 = vmatprep.subr.bf16.mxu0 0
    %162 = vmatpush2.bf16.msra.mxu0 0
    %163 = vmatprep.subr.bf16.mxu0 0
    %164 = vmatpush2.bf16.msra.mxu0 0
    %165 = vmatprep.mubr.bf16.mxu0 0
    %166 = vmatmul.mubr.bf16.gmra.mxu0 %v124
    %v167 = vpop.f32.mrf.mxu0
    %v168 = vadd.f32 %v101, %v167
    %v169 = vpop.f32.mrf.mxu0
    %v170 = vadd.f32 %v105, %v169
    %v171 = vpop.f32.mrf.mxu0
    %v172 = vpop.f32.mrf.mxu0
    %173 = vdwg.mxu0
    %v174 = vmax.f32 %v168, 0.0
    %v175 = vmax.f32 %v170, 0.0
    %v176 = vpack.c.bf16 %v174, %v174
    %v177 = vpack.c.bf16 %v175, %v175
    %v178 = vld [vmem:[#allocation8] sm:$0xff]
    %v179 = vld [vmem:[#allocation8 + $0x8] sm:$0xff]
    %v180 = vld [vmem:[#allocation8 + $0x10] sm:$0xff]
    %v181 = vld [vmem:[#allocation8 + $0x18] sm:$0xff]
    %v182 = vld [vmem:[#allocation8 + $0x20] sm:$0xff]
    %v183 = vld [vmem:[#allocation8 + $0x28] sm:$0xff]
    %v184 = vld [vmem:[#allocation8 + $0x30] sm:$0xff]
    %v185 = vld [vmem:[#allocation8 + $0x38] sm:$0xff]
    %v186 = vld [vmem:[#allocation8 + $0x40] sm:$0xff]
    %v187 = vld [vmem:[#allocation8 + $0x48] sm:$0xff]
    %v188 = vld [vmem:[#allocation8 + $0x50] sm:$0xff]
    %v189 = vld [vmem:[#allocation8 + $0x58] sm:$0xff]
    %v190 = vld [vmem:[#allocation8 + $0x60] sm:$0xff]
    %v191 = vld [vmem:[#allocation8 + $0x68] sm:$0xff]
    %v192 = vld [vmem:[#allocation8 + $0x70] sm:$0xff]
    %v193 = vld [vmem:[#allocation8 + $0x78] sm:$0xff]
    %v194 = vld [vmem:[#allocation8 + $0x80] sm:$0xff]
    %v195 = vld [vmem:[#allocation8 + $0x88] sm:$0xff]
    %v196 = vld [vmem:[#allocation8 + $0x90] sm:$0xff]
    %v197 = vld [vmem:[#allocation8 + $0x98] sm:$0xff]
    %v198 = vld [vmem:[#allocation8 + $0xa0] sm:$0xff]
    %v199 = vld [vmem:[#allocation8 + $0xa8] sm:$0xff]
    %v200 = vld [vmem:[#allocation8 + $0xb0] sm:$0xff]
    %v201 = vld [vmem:[#allocation8 + $0xb8] sm:$0xff]
    %v202 = vld [vmem:[#allocation8 + $0xc0] sm:$0xff]
    %v203 = vld [vmem:[#allocation8 + $0xc8] sm:$0xff]
    %v204 = vld [vmem:[#allocation8 + $0xd0] sm:$0xff]
    %v205 = vld [vmem:[#allocation8 + $0xd8] sm:$0xff]
    %v206 = vld [vmem:[#allocation8 + $0xe0] sm:$0xff]
    %v207 = vld [vmem:[#allocation8 + $0xe8] sm:$0xff]
    %v208 = vld [vmem:[#allocation8 + $0xf0] sm:$0xff]
    %v209 = vld [vmem:[#allocation8 + $0xf8] sm:$0xff]
    %v210 = vld [vmem:[%s5] sm:$0x3]
    %v212 = vlaneseq
    %v213 = vshrl.u32 %v212, 7
    %v214 = vsub.s32 0, %v213
    %v215 = vrot.slane %v210, %v214
    %v216 = vlaneseq
    %v217 = vshrl.u32 %v216, 7
    %v218 = vsub.s32 1, %v217
    %v219 = vrot.slane %v210, %v218
    %v254 = vunpack.c.l.b16 %v178
    %v255 = vunpack.c.h.b16 %v178
    %v256 = vunpack.c.l.b16 %v179
    %v257 = vunpack.c.h.b16 %v179
    %v258 = vunpack.c.l.b16 %v180
    %v259 = vunpack.c.h.b16 %v180
    %v260 = vunpack.c.l.b16 %v181
    %v261 = vunpack.c.h.b16 %v181
    %v262 = vunpack.c.l.b16 %v182
    %v263 = vunpack.c.h.b16 %v182
    %v264 = vunpack.c.l.b16 %v183
    %v265 = vunpack.c.h.b16 %v183
    %v266 = vunpack.c.l.b16 %v184
    %v267 = vunpack.c.h.b16 %v184
    %v268 = vunpack.c.l.b16 %v185
    %v269 = vunpack.c.h.b16 %v185
    %v270 = vunpack.c.l.b16 %v186
    %v271 = vunpack.c.h.b16 %v186
    %v272 = vunpack.c.l.b16 %v187
    %v273 = vunpack.c.h.b16 %v187
    %v274 = vunpack.c.l.b16 %v188
    %v275 = vunpack.c.h.b16 %v188
    %v276 = vunpack.c.l.b16 %v189
    %v277 = vunpack.c.h.b16 %v189
    %v278 = vunpack.c.l.b16 %v190
    %v279 = vunpack.c.h.b16 %v190
    %v280 = vunpack.c.l.b16 %v191
    %v281 = vunpack.c.h.b16 %v191
    %v282 = vunpack.c.l.b16 %v192
    %v283 = vunpack.c.h.b16 %v192
    %v284 = vunpack.c.l.b16 %v193
    %v285 = vunpack.c.h.b16 %v193
    %v286 = vunpack.c.l.b16 %v194
    %v287 = vunpack.c.h.b16 %v194
    %v288 = vunpack.c.l.b16 %v195
    %v289 = vunpack.c.h.b16 %v195
    %v290 = vunpack.c.l.b16 %v196
    %v291 = vunpack.c.h.b16 %v196
    %v292 = vunpack.c.l.b16 %v197
    %v293 = vunpack.c.h.b16 %v197
    %v294 = vunpack.c.l.b16 %v198
    %v295 = vunpack.c.h.b16 %v198
    %v296 = vunpack.c.l.b16 %v199
    %v297 = vunpack.c.h.b16 %v199
    %v298 = vunpack.c.l.b16 %v200
    %v299 = vunpack.c.h.b16 %v200
    %v300 = vunpack.c.l.b16 %v201
    %v301 = vunpack.c.h.b16 %v201
    %v302 = vunpack.c.l.b16 %v202
    %v303 = vunpack.c.h.b16 %v202
    %v304 = vunpack.c.l.b16 %v203
    %v305 = vunpack.c.h.b16 %v203
    %v306 = vunpack.c.l.b16 %v204
    %v307 = vunpack.c.h.b16 %v204
    %v308 = vunpack.c.l.b16 %v205
    %v309 = vunpack.c.h.b16 %v205
    %v310 = vunpack.c.l.b16 %v206
    %v311 = vunpack.c.h.b16 %v206
    %v312 = vunpack.c.l.b16 %v207
    %v313 = vunpack.c.h.b16 %v207
    %v314 = vunpack.c.l.b16 %v208
    %v315 = vunpack.c.h.b16 %v208
    %v316 = vunpack.c.l.b16 %v209
    %v317 = vunpack.c.h.b16 %v209
    %v318 = vpack.c.b16 %v256, %v254
    %v319 = vpack.c.b16 %v257, %v255
    %v320 = vpack.c.b16 %v260, %v258
    %v321 = vpack.c.b16 %v261, %v259
    %v322 = vpack.c.b16 %v264, %v262
    %v323 = vpack.c.b16 %v265, %v263
    %v324 = vpack.c.b16 %v268, %v266
    %v325 = vpack.c.b16 %v269, %v267
    %v326 = vpack.c.b16 %v272, %v270
    %v327 = vpack.c.b16 %v273, %v271
    %v328 = vpack.c.b16 %v276, %v274
    %v329 = vpack.c.b16 %v277, %v275
    %v330 = vpack.c.b16 %v280, %v278
    %v331 = vpack.c.b16 %v281, %v279
    %v332 = vpack.c.b16 %v284, %v282
    %v333 = vpack.c.b16 %v285, %v283
    %v334 = vpack.c.b16 %v288, %v286
    %v335 = vpack.c.b16 %v289, %v287
    %v336 = vpack.c.b16 %v292, %v290
    %v337 = vpack.c.b16 %v293, %v291
    %v338 = vpack.c.b16 %v296, %v294
    %v339 = vpack.c.b16 %v297, %v295
    %v340 = vpack.c.b16 %v300, %v298
    %v341 = vpack.c.b16 %v301, %v299
    %v342 = vpack.c.b16 %v304, %v302
    %v343 = vpack.c.b16 %v305, %v303
    %v344 = vpack.c.b16 %v308, %v306
    %v345 = vpack.c.b16 %v309, %v307
    %v346 = vpack.c.b16 %v312, %v310
    %v347 = vpack.c.b16 %v313, %v311
    %v348 = vpack.c.b16 %v316, %v314
    %v349 = vpack.c.b16 %v317, %v315
    %382 = vmatprep.subr.bf16.mxu0 %v333
    %383 = vmatpush1.bf16.msra.mxu0 %v332
    %384 = vmatprep.subr.bf16.mxu0 %v331
    %385 = vmatpush1.bf16.msra.mxu0 %v330
    %386 = vmatprep.subr.bf16.mxu0 %v329
    %387 = vmatpush1.bf16.msra.mxu0 %v328
    %388 = vmatprep.subr.bf16.mxu0 %v327
    %389 = vmatpush1.bf16.msra.mxu0 %v326
    %390 = vmatprep.subr.bf16.mxu0 %v325
    %391 = vmatpush1.bf16.msra.mxu0 %v324
    %392 = vmatprep.subr.bf16.mxu0 %v323
    %393 = vmatpush1.bf16.msra.mxu0 %v322
    %394 = vmatprep.subr.bf16.mxu0 %v321
    %395 = vmatpush1.bf16.msra.mxu0 %v320
    %396 = vmatprep.subr.bf16.mxu0 %v319
    %397 = vmatpush1.bf16.msra.mxu0 %v318
    %398 = vmatprep.subr.bf16.mxu0 %v349
    %399 = vmatpush2.bf16.msra.mxu0 %v348
    %400 = vmatprep.subr.bf16.mxu0 %v347
    %401 = vmatpush2.bf16.msra.mxu0 %v346
    %402 = vmatprep.subr.bf16.mxu0 %v345
    %403 = vmatpush2.bf16.msra.mxu0 %v344
    %404 = vmatprep.subr.bf16.mxu0 %v343
    %405 = vmatpush2.bf16.msra.mxu0 %v342
    %406 = vmatprep.subr.bf16.mxu0 %v341
    %407 = vmatpush2.bf16.msra.mxu0 %v340
    %408 = vmatprep.subr.bf16.mxu0 %v339
    %409 = vmatpush2.bf16.msra.mxu0 %v338
    %410 = vmatprep.subr.bf16.mxu0 %v337
    %411 = vmatpush2.bf16.msra.mxu0 %v336
    %412 = vmatprep.subr.bf16.mxu0 %v335
    %413 = vmatpush2.bf16.msra.mxu0 %v334
    %414 = vmatprep.mubr.bf16.mxu0 %v177
    %415 = vmatmul.mubr.bf16.gmra.mxu0 %v176
    %v416 = vpop.f32.mrf.mxu0
    %v417 = vadd.f32 %v215, %v416
    %v418 = vpop.f32.mrf.mxu0
    %v419 = vadd.f32 %v219, %v418
    %v420 = vpop.f32.mrf.mxu0
    %v421 = vpop.f32.mrf.mxu0
    %422 = vdwg.mxu0
    %v423 = vmax.f32 %v417, 0.0
    %v424 = vmax.f32 %v419, 0.0
    %v425 = vld [vmem:[%s6] sm:$0x3]
    %v426 = vunpack.c.l.bf16 %v425
    %v428 = vlaneseq
    %v429 = vshrl.u32 %v428, 7
    %v430 = vsub.s32 0, %v429
    %v431 = vrot.slane %v426, %v430
    %v432 = vlaneseq
    %v433 = vshrl.u32 %v432, 7
    %v434 = vsub.s32 2, %v433
    %v435 = vrot.slane %v426, %v434
    %v438 = vlaneseq
    %v439 = vshrl.u32 %v438, 7
    %v440 = vsub.s32 0, %v439
    %v441 = vrot.slane %v431, %v440
    %v442 = vlaneseq
    %v443 = vshrl.u32 %v442, 7
    %v444 = vsub.s32 0, %v443
    %v445 = vrot.slane %v435, %v444
    %v446 = vmul.f32 %v423, %v441
    %v447 = vmul.f32 %v424, %v445
    %v448 = vadd.f32 %v446, %v447
    %449 = vadd.xlane.f32.xlu0 %v448
    %v450 = vpop.xlane.xlu0 %449
    %s451 = sld [smem:[#allocation2]]
    %v452 = vstv %s451
    %v453 = vadd.f32 %v450, %v452
    %vm454 = vcmask 7168
    %455 = vst.msk [vmem:[%s8] sm:$0xff] %vm454, %v453
    // Predicated region
    $region50: #{tpu_custom_call.1} parent=1 // pred_check
      _
    $region51: #{tpu_custom_call.1} parent=1 // pred_check_branch
      %457 = sbr.rel (0) target = $region53
    $region52: #{tpu_custom_call.1} parent=1 // pred_region
      _
    $region53: #{tpu_custom_call.1} parent=1 // pred_fallthru
      _
    // Predicated region
    $region54: #{tpu_custom_call.1} parent=1 // pred_check
      _
    $region55: #{tpu_custom_call.1} parent=1 // pred_check_branch
      %459 = sbr.rel (0) target = $region57
    $region56: #{tpu_custom_call.1} parent=1 // pred_region
      _
    $region57: #{tpu_custom_call.1} parent=1 // pred_fallthru
      _
    %460 = vsyncpa [#allocation4], 1
    %461 = vsyncpa [#allocation6], 1
    %462 = vsyncpa [#allocation9], 1

</llo_original>
